<compile_context>
chip_gen: v7x
topology: tpu7x:2x2x1
jax: 0.10.0
libtpu: 0.0.40
codegen_flags: <defaults>
</compile_context>

<pallas_src>
import functools

import jax
import jax.numpy as jnp
from jax.experimental import pallas as pl
from jax.experimental.pallas import tpu as pltpu


def _round_up(n, m):
    return ((n + m - 1) // m) * m


def _focal_factor(one_minus_scores, focal_power):
    """(1 - scores)**focal_power, specialized to avoid generic pow (exp+log on EUP)."""
    fp = float(focal_power)
    if fp == 0.0:
        return jnp.ones_like(one_minus_scores)
    if fp.is_integer() and 1.0 <= fp <= 8.0:
        r = one_minus_scores
        for _ in range(int(fp) - 1):
            r = r * one_minus_scores
        return r
    return jnp.power(one_minus_scores, fp)  # generic fallback (rare)


def _focal_loss_kernel(out_ref, tgt_ref, w_ref, part_ref, *, focal_power,
                       batch_size, tile_b):
    i = pl.program_id(1)                           # inner (reduction) grid axis
    n_inner = pl.num_programs(1)
    tile_idx = pl.program_id(0) * n_inner + i      # global batch-tile index

    x = out_ref[...].astype(jnp.float32)           # (L, TILE_B) logits
    t = tgt_ref[...].astype(jnp.float32)           # (L, TILE_B) targets
    w = w_ref[...].astype(jnp.float32)             # (L, 1) class weights (detached)

    # 1 - scores == sigmoid(-x) where target == 1, else sigmoid(x)
    one_minus_scores = jax.nn.sigmoid(jnp.where(t == 1.0, -x, x))
    focal = _focal_factor(one_minus_scores, focal_power)

    # BCE-with-logits == BCE(sigmoid(x), t) (modulo torch's -100 log clamp)
    cost = jnp.maximum(x, 0.0) - x * t + jnp.log1p(jnp.exp(-jnp.abs(x)))

    contrib = focal * cost * w                     # (L,1) weights broadcast over lanes

    # Mask padded batch columns (B was rounded up to a multiple of TILE_B).
    col = tile_idx * tile_b + jax.lax.broadcasted_iota(jnp.int32, contrib.shape, 1)
    contrib = jnp.where(col < batch_size, contrib, 0.0)

    # Per-core accumulator: the output block stays resident across the inner axis.
    @pl.when(i == 0)
    def _():
        part_ref[...] = jnp.zeros_like(part_ref)
    # scalar partial broadcast-added into the (8,128) accumulator block
    part_ref[...] += jnp.sum(contrib)


def focal_gradnorm_loss(output, target, inter_class_weights, focal_power=1.0,
                        *, max_tile_b=8192, num_partials=2):
    """Forward of FocalGradNormLoss; returns the scalar total_task_loss."""
    B, L = output.shape

    # Lane-dense layout: labels -> sublanes, batch -> 128-lane axis.
    out_t = jnp.asarray(output).T                          # (L, B)
    tgt_t = jnp.asarray(target).T                          # (L, B)
    w = jnp.asarray(inter_class_weights, jnp.float32).reshape(L, 1)

    tile_b = min(max_tile_b, _round_up(B, 128))
    n_tiles = -(-B // tile_b)
    n_inner = -(-n_tiles // num_partials)
    b_pad = num_partials * n_inner * tile_b
    if b_pad != B:
        out_t = jnp.pad(out_t, ((0, 0), (0, b_pad - B)))
        tgt_t = jnp.pad(tgt_t, ((0, 0), (0, b_pad - B)))

    kernel = functools.partial(_focal_loss_kernel,
                               focal_power=float(focal_power),
                               batch_size=B, tile_b=tile_b)

    partials = pl.pallas_call(
        kernel,
        out_shape=jax.ShapeDtypeStruct((num_partials * 8, 128), jnp.float32),
        grid=(num_partials, n_inner),
        in_specs=[
            pl.BlockSpec((L, tile_b), lambda c, i: (0, c * n_inner + i)),
            pl.BlockSpec((L, tile_b), lambda c, i: (0, c * n_inner + i)),
            pl.BlockSpec((L, 1), lambda c, i: (0, 0)),      # weights stay resident
        ],
        out_specs=pl.BlockSpec((8, 128), lambda c, i: (c, 0)),
        compiler_params=pltpu.CompilerParams(
            dimension_semantics=("parallel", "arbitrary")),
    )(out_t, tgt_t, w)

    # Each core's (8,128) accumulator block holds its partial sum (broadcast); pick one
    # element per block, add the per-core partials, normalize by the two fused means.
    return jnp.sum(partials[::8, 0]) / (B * L)


def _reference(output, target, inter_class_weights, focal_power=1.0):
    """Torch-faithful reference (probs-space BCE with -100 log clamp)."""
    probs = jax.nn.sigmoid(output)
    scores = jnp.where(target == 1.0, probs, 1.0 - probs)
    cost = -(target * jnp.maximum(jnp.log(probs), -100.0)
             + (1.0 - target) * jnp.maximum(jnp.log1p(-probs), -100.0))
    focal = jnp.power(1.0 - scores, focal_power) * cost
    task_losses = jnp.mean(focal, axis=0)
    return jnp.mean(task_losses * inter_class_weights)


if __name__ == "__main__":
    key = jax.random.PRNGKey(0)
    k1, k2, k3 = jax.random.split(key, 3)

    N_LABELS = 14   # module normalizes weights to sum to 14 -> 14 labels (CheXpert-style)
    BATCH = 8

    output = jax.random.normal(k1, (BATCH, N_LABELS), dtype=jnp.float32)
    target = (jax.random.uniform(k2, (BATCH, N_LABELS)) < 0.5).astype(jnp.float32)

    # __init__ state: inter_class_weights = ones(N_LABELS); focal_power = 1
    ones_w = jnp.ones((N_LABELS,), dtype=jnp.float32)
    loss = focal_gradnorm_loss(output, target, ones_w, 1.0)
    jax.block_until_ready(loss)
    ref = _reference(output, target, ones_w, 1.0)
    assert jnp.allclose(loss, ref, rtol=1e-4, atol=1e-6), (loss, ref)

    # Extra check: GradNorm-updated (non-uniform) weights + integer focal power.
    rand_w = jax.random.uniform(k3, (N_LABELS,), minval=0.5, maxval=1.5)
    rand_w = rand_w * N_LABELS / rand_w.sum()
    loss2 = focal_gradnorm_loss(output, target, rand_w, 2.0)
    jax.block_until_ready(loss2)
    ref2 = _reference(output, target, rand_w, 2.0)
    assert jnp.allclose(loss2, ref2, rtol=1e-4, atol=1e-6), (loss2, ref2)

    print("KERNEL_OK")
</pallas_src>

<mosaic_0001>
module attributes {stable_mosaic.version = 11 : i64} {
  func.func @_focal_loss_kernel(%arg0: i32, %arg1: i32, %arg2: memref<14x128xf32, #tpu.memory_space<vmem>>, %arg3: memref<14x128xf32, #tpu.memory_space<vmem>>, %arg4: memref<14x1xf32, #tpu.memory_space<vmem>>, %arg5: memref<8x128xf32, #tpu.memory_space<vmem>>) attributes {dimension_semantics = [#tpu.dimension_semantics<parallel>, #tpu.dimension_semantics<arbitrary>], iteration_bounds = array<i64: 2, 1>, scalar_prefetch = 0 : i64, scratch_operands = 0 : i64, tpu.core_type = #tpu.core_type<tc>, window_params = [{transform_indices = @transform_0, window_bounds = array<i64: 14, 128>}, {transform_indices = @transform_1, window_bounds = array<i64: 14, 128>}, {pipeline_mode = #tpu.pipeline_mode<synchronous>, transform_indices = @transform_2, window_bounds = array<i64: 14, 1>}, {transform_indices = @transform_3, window_bounds = array<i64: 8, 128>}]} {
    %c1_i32 = arith.constant 1 : i32
    %0 = arith.muli %arg0, %c1_i32 : i32
    %1 = arith.addi %0, %arg1 : i32
    %c0 = arith.constant 0 : index
    %c0_0 = arith.constant 0 : index
    %2 = vector.load %arg2[%c0, %c0_0] : memref<14x128xf32, #tpu.memory_space<vmem>>, vector<14x128xf32>
    %c0_1 = arith.constant 0 : index
    %c0_2 = arith.constant 0 : index
    %3 = vector.load %arg3[%c0_1, %c0_2] : memref<14x128xf32, #tpu.memory_space<vmem>>, vector<14x128xf32>
    %c0_3 = arith.constant 0 : index
    %c0_4 = arith.constant 0 : index
    %4 = vector.load %arg4[%c0_3, %c0_4] : memref<14x1xf32, #tpu.memory_space<vmem>>, vector<14x1xf32>
    %cst = arith.constant 1.000000e+00 : f32
    %5 = vector.broadcast %cst : f32 to vector<14x128xf32>
    %6 = arith.cmpf oeq, %3, %5 : vector<14x128xf32>
    %cst_5 = arith.constant 0.000000e+00 : f32
    %7 = vector.broadcast %cst_5 : f32 to vector<14x128xf32>
    %8 = arith.subf %7, %2 : vector<14x128xf32>
    %9 = arith.select %6, %8, %2 : vector<14x128xi1>, vector<14x128xf32>
    %10 = arith.negf %9 : vector<14x128xf32>
    %11 = math.exp %10 : vector<14x128xf32>
    %cst_6 = arith.constant 1.000000e+00 : f32
    %12 = vector.broadcast %cst_6 : f32 to vector<14x128xf32>
    %13 = arith.addf %12, %11 : vector<14x128xf32>
    %14 = arith.divf %12, %13 : vector<14x128xf32>
    %cst_7 = arith.constant 0.000000e+00 : f32
    %15 = vector.broadcast %cst_7 : f32 to vector<14x128xf32>
    %16 = arith.maximumf %2, %15 : vector<14x128xf32>
    %17 = arith.mulf %2, %3 : vector<14x128xf32>
    %18 = arith.subf %16, %17 : vector<14x128xf32>
    %19 = math.absf %2 : vector<14x128xf32>
    %cst_8 = arith.constant 0.000000e+00 : f32
    %20 = vector.broadcast %cst_8 : f32 to vector<14x128xf32>
    %21 = arith.subf %20, %19 : vector<14x128xf32>
    %22 = math.exp %21 : vector<14x128xf32>
    %23 = math.log1p %22 : vector<14x128xf32>
    %24 = arith.addf %18, %23 : vector<14x128xf32>
    %25 = arith.mulf %14, %24 : vector<14x128xf32>
    %26 = vector.broadcast %4 : vector<14x1xf32> to vector<14x128xf32>
    %27 = arith.mulf %25, %26 : vector<14x128xf32>
    %c128_i32 = arith.constant 128 : i32
    %28 = arith.muli %1, %c128_i32 : i32
    %29 = tpu.iota {dimensions = array<i32: 1>} : vector<14x128xi32>
    %30 = vector.broadcast %28 : i32 to vector<14x128xi32>
    %31 = arith.addi %30, %29 : vector<14x128xi32>
    %c8_i32 = arith.constant 8 : i32
    %32 = vector.broadcast %c8_i32 : i32 to vector<14x128xi32>
    %33 = arith.cmpi slt, %31, %32 : vector<14x128xi32>
    %cst_9 = arith.constant 0.000000e+00 : f32
    %34 = vector.broadcast %cst_9 : f32 to vector<14x128xf32>
    %35 = arith.select %33, %27, %34 : vector<14x128xi1>, vector<14x128xf32>
    %c0_i32 = arith.constant 0 : i32
    %36 = arith.cmpi eq, %arg1, %c0_i32 : i32
    %37 = arith.extui %36 : i1 to i32
    %c0_i32_10 = arith.constant 0 : i32
    %38 = arith.cmpi ne, %37, %c0_i32_10 : i32
    scf.if %38 {
      %cst_16 = arith.constant 0.000000e+00 : f32
      %47 = vector.broadcast %cst_16 : f32 to vector<8x128xf32>
      %c0_17 = arith.constant 0 : index
      %c0_18 = arith.constant 0 : index
      %48 = vector.load %arg5[%c0_17, %c0_18] : memref<8x128xf32, #tpu.memory_space<vmem>>, vector<8x128xf32>
      tpu.vector_store %arg5[%c0_17, %c0_18], %47 {strides = array<i32>} : memref<8x128xf32, #tpu.memory_space<vmem>>, vector<8x128xf32>,
    } else {
    }
    %c0_11 = arith.constant 0 : index
    %c0_12 = arith.constant 0 : index
    %39 = vector.load %arg5[%c0_11, %c0_12] : memref<8x128xf32, #tpu.memory_space<vmem>>, vector<8x128xf32>
    %40 = vector.shape_cast %35 : vector<14x128xf32> to vector<1x14x128xf32>
    %cst_13 = arith.constant dense<0.000000e+00> : vector<1xf32>
    %41 = vector.multi_reduction <add>, %40, %cst_13 [1, 2] : vector<1x14x128xf32> to vector<1xf32>
    %42 = vector.shape_cast %41 : vector<1xf32> to vector<1x1x1xf32>
    %43 = vector.extract %42[0, 0, 0] : f32 from vector<1x1x1xf32>
    %44 = vector.broadcast %43 : f32 to vector<8x128xf32>
    %45 = arith.addf %39, %44 : vector<8x128xf32>
    %c0_14 = arith.constant 0 : index
    %c0_15 = arith.constant 0 : index
    %46 = vector.load %arg5[%c0_14, %c0_15] : memref<8x128xf32, #tpu.memory_space<vmem>>, vector<8x128xf32>
    tpu.vector_store %arg5[%c0_14, %c0_15], %45 {strides = array<i32>} : memref<8x128xf32, #tpu.memory_space<vmem>>, vector<8x128xf32>,
    return
  }
  func.func @transform_0(%arg0: i32, %arg1: i32) -> (i32, i32) {
    %c1_i32 = arith.constant 1 : i32
    %0 = arith.muli %arg0, %c1_i32 : i32
    %1 = arith.addi %0, %arg1 : i32
    %c0_i32 = arith.constant 0 : i32
    %c0_i32_0 = arith.constant 0 : i32
    return %c0_i32, %1 : i32, i32
  }
  func.func @transform_1(%arg0: i32, %arg1: i32) -> (i32, i32) {
    %c1_i32 = arith.constant 1 : i32
    %0 = arith.muli %arg0, %c1_i32 : i32
    %1 = arith.addi %0, %arg1 : i32
    %c0_i32 = arith.constant 0 : i32
    %c0_i32_0 = arith.constant 0 : i32
    return %c0_i32, %1 : i32, i32
  }
  func.func @transform_2(%arg0: i32, %arg1: i32) -> (i32, i32) {
    %c0_i32 = arith.constant 0 : i32
    %c0_i32_0 = arith.constant 0 : i32
    %c0_i32_1 = arith.constant 0 : i32
    return %c0_i32, %c0_i32_0 : i32, i32
  }
  func.func @transform_3(%arg0: i32, %arg1: i32) -> (i32, i32) {
    %c0_i32 = arith.constant 0 : i32
    %c0_i32_0 = arith.constant 0 : i32
    return %arg0, %c0_i32 : i32, i32
  }
}

</mosaic_0001>

<llo_original>
// kernel: tpu_custom_call.1
$region0: #{tpu_custom_call.1}
  #allocation0 [shape = 'u32[]', space=smem, size = 0x4, offset = 0x4, fixed_abs, tag = 'smem constant byte address 0x4 - core index']
  #allocation1 [shape = 'u32[144,128]{1,0:T(1,128)}', space=vmem, size = 0x12000, scoped, tag = 'internal scratch']
  %s0 = inlined_call_operand.hbm [shape: f32[14,256], index: 0, kind: input, shape index: {}]
  %s1 = inlined_call_operand.hbm [shape: f32[14,256], index: 1, kind: input, shape index: {}]
  %s2 = inlined_call_operand.vmem [shape: f32[14,1], index: 2, kind: input, shape index: {}]
  %s3 = inlined_call_operand.hbm [shape: f32[16,128], index: 3, kind: output, shape index: {}]
  %s4 = sld [smem:[#allocation0]]
  $region57: #{tpu_custom_call.1} parent=0
    _
  %s6 = ssub.s32 1, %s4
  %s7 = scalar_select 0, %s6, %s4
  $region1: #{tpu_custom_call.1} parent=0
    #allocation2 [shape = 'u8[16384]{0}', space=vmem, size = 0x4000, scoped, tag = 'input window, operand 0']
    #allocation3 [shape = 's32[2]{0}', space=sflag, size = 0x8, scoped, tag = 'scoped memory for tpu_custom_call.1']
    #allocation4 [shape = 's32[2]{0}', space=sflag, size = 0x8, scoped, tag = 'scoped memory for tpu_custom_call.1']
    #allocation5 [shape = 'u8[16384]{0}', space=vmem, size = 0x4000, scoped, tag = 'input window, operand 1']
    #allocation6 [shape = 's32[2]{0}', space=sflag, size = 0x8, scoped, tag = 'scoped memory for tpu_custom_call.1']
    #allocation7 [shape = 'u8[8192]{0}', space=vmem, size = 0x2000, scoped, tag = 'output window, operand 0']
    %8 = vsyncpa [#allocation3], 0
    %s9 = scalar_lea.sflag [#allocation3], 1
    %10 = vsyncpa %s9, 0
    %11 = vsyncpa [#allocation6], 0
    %s12 = scalar_lea.sflag [#allocation6], 1
    %13 = vsyncpa %s12, 0
    %14 = vsyncpa [#allocation4], 0
    %s15 = scalar_lea.sflag [#allocation4], 1
    %16 = vsyncpa %s15, 0
    loop: start=0, step=1, limit=4
    $region2: #{tpu_custom_call.1} parent=1 // loop_pre_header
      _
    $region3: #{tpu_custom_call.1} parent=1 // loop_header
      %s18 = sphi 0, %s22
      %p19 = scmp.ge.s32.totalorder %s18, 4
      %s25 = sphi 0, %s37
      %s26 = sphi 0, %s33
      %s27 = sphi 0, %s25
      %s28 = sphi 0, %s26
      %s29 = sphi 0, %s27
      %s30 = sphi 0, %s28
      %s42 = sphi 0, %s44
      %s45 = sphi 0, %s42
      %s46 = sphi 0, %s45
      %s62 = sphi 0, %s46
      %s70 = sphi 0, %s72
      %s73 = sphi 0, %s70
      %s74 = sphi 0, %s73
      %s90 = sphi 0, %s74
      %s94 = sphi 0, %s94
      %s96 = sphi 0, %s94
      %s97 = sphi 0, %s96
      %s111 = sphi 0, %s97
      %s117 = sphi 0, %s119
      %s120 = sphi 0, %s117
      %s121 = sphi 0, %s120
      %s137 = sphi 0, %s121
    $region4: #{tpu_custom_call.1} parent=1 // loop_header_branch
      %21 = sbr.rel (%p19) target = $region8
    $region5: #{tpu_custom_call.1} parent=1 // loop_body
      %s23 = ssub.s32 %s18, 1
      %s24 = ssub.s32 %s18, 2
      %s31 = sadd.s32 1, %s26
      %p32 = scmp.ge.s32.totalorder %s31, 1
      %s33 = scalar_select %p32, 0, %s31
      %s34 = sadd.s32 1, %s25
      %s35 = scalar_select %p32, %s34, %s25
      %p36 = scmp.ge.s32.totalorder %s35, 2
      %s37 = scalar_select %p36, 0, %s35
      %s38 = sadd.s32 %s25, %s26
      %s39 = sadd.s32 %s37, %s33
      %s40 = ssub.s32 %s38, %s39
      %p41 = scmp.eq.s32.totalorder %s40, 0
      %s43 = sadd.s32 %s42, 1
      %s44 = scalar_select %p41, %s42, %s43
      %p47 = pneg %p41
      %p48 = scmp.eq.s32.totalorder %s18, 1
      %p49 = por %p47, %p48
      %p50 = scmp.ne.s32.totalorder %s42, %s45
      %p51 = scmp.eq.s32.totalorder %s18, 0
      %p52 = por %p50, %p51
      %p53 = scmp.ne.s32.totalorder %s42, %s45
      %p54 = scmp.eq.s32.totalorder %s23, 1
      %p55 = por %p53, %p54
      %p56 = scmp.ne.s32.totalorder %s45, %s46
      %p57 = scmp.eq.s32.totalorder %s23, 0
      %p58 = por %p56, %p57
      %p59 = scmp.ne.s32.totalorder %s45, %s46
      %p60 = scmp.eq.s32.totalorder %s24, 1
      %p61 = por %p59, %p60
      %p63 = scmp.ne.s32.totalorder %s46, %s62
      %p64 = scmp.eq.s32.totalorder %s24, 0
      %p65 = por %p63, %p64
      %s66 = sadd.s32 %s25, %s26
      %s67 = sadd.s32 %s37, %s33
      %s68 = ssub.s32 %s66, %s67
      %p69 = scmp.eq.s32.totalorder %s68, 0
      %s71 = sadd.s32 %s70, 1
      %s72 = scalar_select %p69, %s70, %s71
      %p75 = pneg %p69
      %p76 = scmp.eq.s32.totalorder %s18, 1
      %p77 = por %p75, %p76
      %p78 = scmp.ne.s32.totalorder %s70, %s73
      %p79 = scmp.eq.s32.totalorder %s18, 0
      %p80 = por %p78, %p79
      %p81 = scmp.ne.s32.totalorder %s70, %s73
      %p82 = scmp.eq.s32.totalorder %s23, 1
      %p83 = por %p81, %p82
      %p84 = scmp.ne.s32.totalorder %s73, %s74
      %p85 = scmp.eq.s32.totalorder %s23, 0
      %p86 = por %p84, %p85
      %p87 = scmp.ne.s32.totalorder %s73, %s74
      %p88 = scmp.eq.s32.totalorder %s24, 1
      %p89 = por %p87, %p88
      %p91 = scmp.ne.s32.totalorder %s74, %s90
      %p92 = scmp.eq.s32.totalorder %s24, 0
      %p93 = por %p91, %p92
      %s95 = sadd.s32 %s94, 1
      %p98 = scmp.eq.s32.totalorder %s18, 1
      %p99 = scmp.ne.s32.totalorder %s94, %s96
      %p100 = scmp.eq.s32.totalorder %s18, 0
      %p101 = por %p99, %p100
      %p102 = scmp.ne.s32.totalorder %s94, %s96
      %p103 = scmp.eq.s32.totalorder %s23, 1
      %p104 = por %p102, %p103
      %p105 = scmp.ne.s32.totalorder %s96, %s97
      %p106 = scmp.eq.s32.totalorder %s23, 0
      %p107 = por %p105, %p106
      %p108 = scmp.ne.s32.totalorder %s96, %s97
      %p109 = scmp.eq.s32.totalorder %s24, 1
      %p110 = por %p108, %p109
      %p112 = scmp.ne.s32.totalorder %s97, %s111
      %p113 = scmp.eq.s32.totalorder %s24, 0
      %p114 = por %p112, %p113
      %s115 = ssub.s32 %s25, %s37
      %p116 = scmp.eq.s32.totalorder %s115, 0
      %s118 = sadd.s32 %s117, 1
      %s119 = scalar_select %p116, %s117, %s118
      %p122 = pneg %p116
      %p123 = scmp.eq.s32.totalorder %s18, 1
      %p124 = por %p122, %p123
      %p125 = scmp.ne.s32.totalorder %s117, %s120
      %p126 = scmp.eq.s32.totalorder %s18, 0
      %p127 = por %p125, %p126
      %p128 = scmp.ne.s32.totalorder %s117, %s120
      %p129 = scmp.eq.s32.totalorder %s23, 1
      %p130 = por %p128, %p129
      %p131 = scmp.ne.s32.totalorder %s120, %s121
      %p132 = scmp.eq.s32.totalorder %s23, 0
      %p133 = por %p131, %p132
      %p134 = scmp.ne.s32.totalorder %s120, %s121
      %p135 = scmp.eq.s32.totalorder %s24, 1
      %p136 = por %p134, %p135
      %p138 = scmp.ne.s32.totalorder %s121, %s137
      %p139 = scmp.eq.s32.totalorder %s24, 0
      %p140 = por %p138, %p139
      %p141 = scmp.le.s32.totalorder 1, %s18
      %p142 = scmp.lt.s32.totalorder %s18, 3
      %p143 = pnand %p141, %p142
      %p144 = pneg %p143
      // Predicated region
      $region9: #{tpu_custom_call.1} parent=5 // pred_check
        _
      $region10: #{tpu_custom_call.1} parent=5 // pred_check_branch
        %146 = sbr.rel (%p143) target = $region12
      $region11: #{tpu_custom_call.1} parent=5 // pred_region
        %s147 = ssub.s32 %s18, 1
        // Predicated region
        $region13: #{tpu_custom_call.1} parent=11 // pred_check
          %p148 = pneg %p107
        $region14: #{tpu_custom_call.1} parent=11 // pred_check_branch
          %150 = sbr.rel (%p148) target = $region16
        $region15: #{tpu_custom_call.1} parent=11 // pred_region
          _
        $region16: #{tpu_custom_call.1} parent=11 // pred_fallthru
          _
      $region12: #{tpu_custom_call.1} parent=5 // pred_fallthru
        _
      %p151 = scmp.lt.s32.totalorder %s18, 2
      // Predicated region
      $region17: #{tpu_custom_call.1} parent=5 // pred_check
        %p152 = pneg %p151
      $region18: #{tpu_custom_call.1} parent=5 // pred_check_branch
        %154 = sbr.rel (%p152) target = $region20
      $region19: #{tpu_custom_call.1} parent=5 // pred_region
        // Predicated region
        $region21: #{tpu_custom_call.1} parent=19 // pred_check
          %p155 = pneg %p52
        $region22: #{tpu_custom_call.1} parent=19 // pred_check_branch
          %157 = sbr.rel (%p155) target = $region24
        $region23: #{tpu_custom_call.1} parent=19 // pred_region
          %s158 = sand.u32 %s42, 1
          %s159 = scalar_lea.sflag [#allocation3], %s158
          %s160 = sand.u32 %s42, 1
          %s161 = smul.addr %s160, 16
          %s162 = scalar_lea.vmem [#allocation2], %s161
          %s163 = sadd.s32 %s25, %s26
          %s165 = ssub.s32 256, 256
          %166 = vsyncadd %s159, %s165
          %s167 = smul.addr %s163, 128
          %s168 = scalar_lea.hbm %s0, %s167
          %s169 = sshll.u32 %s162, 4
          %s170 = int_to_ptr.vmem [resolvable:$true] %s169
          %175 = dma.hbm_to_vmem [thread:$0]  %s168, 256, %s170, %s159, 256, 128, 8
        $region24: #{tpu_custom_call.1} parent=19 // pred_fallthru
          _
        // Predicated region
        $region25: #{tpu_custom_call.1} parent=19 // pred_check
          %p176 = pneg %p80
        $region26: #{tpu_custom_call.1} parent=19 // pred_check_branch
          %178 = sbr.rel (%p176) target = $region28
        $region27: #{tpu_custom_call.1} parent=19 // pred_region
          %s179 = sand.u32 %s70, 1
          %s180 = scalar_lea.sflag [#allocation6], %s179
          %s181 = sand.u32 %s70, 1
          %s182 = smul.addr %s181, 16
          %s183 = scalar_lea.vmem [#allocation5], %s182
          %s184 = sadd.s32 %s25, %s26
          %s186 = ssub.s32 256, 256
          %187 = vsyncadd %s180, %s186
          %s188 = smul.addr %s184, 128
          %s189 = scalar_lea.hbm %s1, %s188
          %s190 = sshll.u32 %s183, 4
          %s191 = int_to_ptr.vmem [resolvable:$true] %s190
          %196 = dma.hbm_to_vmem [thread:$0]  %s189, 256, %s191, %s180, 256, 128, 8
        $region28: #{tpu_custom_call.1} parent=19 // pred_fallthru
          _
      $region20: #{tpu_custom_call.1} parent=5 // pred_fallthru
        _
      %p197 = scmp.le.s32.totalorder 1, %s18
      %p198 = scmp.lt.s32.totalorder %s18, 3
      %p199 = pnand %p197, %p198
      %p200 = pneg %p199
      // Predicated region
      $region29: #{tpu_custom_call.1} parent=5 // pred_check
        _
      $region30: #{tpu_custom_call.1} parent=5 // pred_check_branch
        %202 = sbr.rel (%p199) target = $region32
      $region31: #{tpu_custom_call.1} parent=5 // pred_region
        %s203 = ssub.s32 %s18, 1
        %s204 = sand.u32 %s45, 1
        %s205 = scalar_lea.sflag [#allocation3], %s204
        %s206 = sand.u32 %s45, 1
        %s207 = smul.addr %s206, 16
        %s208 = scalar_lea.vmem [#allocation2], %s207
        // Predicated region
        $region33: #{tpu_custom_call.1} parent=31 // pred_check
          %p209 = pneg %p58
        $region34: #{tpu_custom_call.1} parent=31 // pred_check_branch
          %211 = sbr.rel (%p209) target = $region36
        $region35: #{tpu_custom_call.1} parent=31 // pred_region
          %212 = dma.done %s205, 256
        $region36: #{tpu_custom_call.1} parent=31 // pred_fallthru
          _
        %s213 = sand.u32 %s73, 1
        %s214 = scalar_lea.sflag [#allocation6], %s213
        %s215 = sand.u32 %s73, 1
        %s216 = smul.addr %s215, 16
        %s217 = scalar_lea.vmem [#allocation5], %s216
        // Predicated region
        $region37: #{tpu_custom_call.1} parent=31 // pred_check
          %p218 = pneg %p86
        $region38: #{tpu_custom_call.1} parent=31 // pred_check_branch
          %220 = sbr.rel (%p218) target = $region40
        $region39: #{tpu_custom_call.1} parent=31 // pred_region
          %221 = dma.done %s214, 256
        $region40: #{tpu_custom_call.1} parent=31 // pred_fallthru
          _
        %s222 = sand.u32 %s45, 1
        %s223 = scalar_lea.sflag [#allocation3], %s222
        %s224 = sand.u32 %s45, 1
        %s225 = smul.addr %s224, 16
        %s226 = scalar_lea.vmem [#allocation2], %s225
        %p227 = pneg %p58
        %p228 = pneg %p55
        %s229 = sand.u32 %s73, 1
        %s230 = scalar_lea.sflag [#allocation6], %s229
        %s231 = sand.u32 %s73, 1
        %s232 = smul.addr %s231, 16
        %s233 = scalar_lea.vmem [#allocation5], %s232
        %p234 = pneg %p86
        %p235 = pneg %p83
        %p236 = pneg %p107
        %p237 = pneg %p104
        %p238 = pneg %p133
        %p239 = pneg %p130
        %s240 = sand.u32 %s120, 1
        %s241 = scalar_lea.sflag [#allocation4], %s240
        %s242 = sand.u32 %s120, 1
        %s243 = smul.addr %s242, 8
        %s244 = scalar_lea.vmem [#allocation7], %s243
        %s245 = sadd.s32 %s27, %s28
        %s246 = sadd.s32 %s27, %s28
        %s247 = sadd.s32 %s27, %s28
        %v248 = vld [vmem:[%s208] sm:$0xff]
        %v249 = vld [vmem:[%s208 + $0x8] sm:$0x3f]
        %v250 = vld [vmem:[%s217] sm:$0xff]
        %v251 = vld [vmem:[%s217 + $0x8] sm:$0x3f]
        %v252 = vld [vmem:[%s2] sm:$0xff]
        %v253 = vld [vmem:[%s2 + $0x8] sm:$0x3f]
        %vm254 = vcmp.eq.f32.partialorder %v250, 1.0
        %vm255 = vcmp.eq.f32.partialorder %v251, 1.0
        %v256 = vsub.f32 0.0, %v248
        %v257 = vsub.f32 0.0, %v249
        %v258 = vsel %vm254, %v256, %v248
        %v259 = vsel %vm255, %v257, %v249
        %v260 = vxor.u32 %v258, 2147483648
        %v261 = vxor.u32 %v259, 2147483648
        %v262 = vmul.f32 %v260, 1.442695
        %v263 = vpow.pop %v262
        %v264 = vmul.f32 %v261, 1.442695
        %v265 = vpow.pop %v264
        %v266 = vadd.f32 %v263, 1.0
        %v267 = vadd.f32 %v265, 1.0
        %v268 = vrcp.pop %v266
        %v269 = vmul.f32 1.0, %v268
        %v270 = vrcp.pop %v267
        %v271 = vmul.f32 1.0, %v270
        %v272 = vmax.f32 %v248, 0.0
        %v273 = vmax.f32 %v249, 0.0
        %v274 = vmul.f32 %v248, %v250
        %v275 = vmul.f32 %v249, %v251
        %v276 = vsub.f32 %v272, %v274
        %v277 = vsub.f32 %v273, %v275
        %v278 = vand.u32 2147483647, %v248
        %v279 = vand.u32 2147483647, %v249
        %v280 = vsub.f32 0.0, %v278
        %v281 = vsub.f32 0.0, %v279
        %v282 = vmul.f32 %v280, 1.442695
        %v283 = vpow.pop %v282
        %v284 = vmul.f32 %v281, 1.442695
        %v285 = vpow.pop %v284
        %v286 = vadd.f32 %v283, 1.0
        %v287 = vlog2.pop %v286
        %v288 = vmul.f32 %v287, 0.6931472
        %v289 = vmul.f32 -0.5, %v283
        %v290 = vadd.f32 %v289, 1.0
        %v291 = vmul.f32 %v290, %v283
        %v292 = vand.u32 2147483647, %v283
        %vm293 = vcmp.lt.f32.partialorder %v292, 0.0004427343
        %v294 = vsel %vm293, %v291, %v288
        %v295 = vadd.f32 %v285, 1.0
        %v296 = vlog2.pop %v295
        %v297 = vmul.f32 %v296, 0.6931472
        %v298 = vmul.f32 -0.5, %v285
        %v299 = vadd.f32 %v298, 1.0
        %v300 = vmul.f32 %v299, %v285
        %v301 = vand.u32 2147483647, %v285
        %vm302 = vcmp.lt.f32.partialorder %v301, 0.0004427343
        %v303 = vsel %vm302, %v300, %v297
        %v304 = vadd.f32 %v276, %v294
        %v305 = vadd.f32 %v277, %v303
        %v306 = vmul.f32 %v269, %v304
        %v307 = vmul.f32 %v271, %v305
        %309 = vset.pattern.permute.xlu0 0
        %310 = vperm.xlu0 %309, %v252
        %v311 = vpop.permute.xlu0 %310
        %314 = vset.pattern.permute.xlu0 0
        %315 = vperm.xlu0 %314, %v253
        %v316 = vpop.permute.xlu0 %315
        %v318 = vmul.f32 %v306, %v311
        %v319 = vmul.f32 %v307, %v316
        %s320 = smul.u32 %s247, 128
        %v321 = vlaneseq
        %v322 = vand.u32 %v321, 127
        %v323 = vstv %s320
        %v324 = vadd.s32 %v323, %v322
        %vm325 = vcmp.lt.s32.totalorder %v324, 8
        %v326 = vsel %vm325, %v318, 0.0
        %v327 = vsel %vm325, %v319, 0.0
        %p328 = scmp.eq.s32.totalorder %s28, 0
        // Predicated region
        $region41: #{tpu_custom_call.1} parent=31 // pred_check
          %p329 = pneg %p328
        $region42: #{tpu_custom_call.1} parent=31 // pred_check_branch
          %331 = sbr.rel (%p329) target = $region44
        $region43: #{tpu_custom_call.1} parent=31 // pred_region
          %332 = vst [vmem:[%s244] sm:$0xff] 0.0
        $region44: #{tpu_custom_call.1} parent=31 // pred_fallthru
          _
        %v333 = vld [vmem:[%s244] sm:$0xff]
        %vm334 = vcmask 1045504
        %v335 = vsel %vm334, %v327, 0.0
        %v336 = vadd.f32 %v326, %v335
        %337 = vadd.xlane.f32.xlu0 %v336
        %v338 = vpop.xlane.xlu0 %337
        %v339 = vrot.slane %v338, 4
        %v340 = vadd.f32 %v338, %v339
        %v341 = vrot.slane %v340, 2
        %v342 = vadd.f32 %v340, %v341
        %v343 = vrot.slane %v342, 1
        %v344 = vadd.f32 %v342, %v343
        %s345 = vtos %v344
        %v346 = vstv %s345
        %v347 = vadd.f32 %v333, %v346
        %348 = vst [vmem:[%s244] sm:$0xff] %v347
        %s349 = sand.u32 %s120, 1
        %s350 = scalar_lea.sflag [#allocation4], %s349
        %s351 = sand.u32 %s120, 1
        %s352 = smul.addr %s351, 8
        %s353 = scalar_lea.vmem [#allocation7], %s352
        // Predicated region
        $region45: #{tpu_custom_call.1} parent=31 // pred_check
          %p354 = pneg %p130
        $region46: #{tpu_custom_call.1} parent=31 // pred_check_branch
          %356 = sbr.rel (%p354) target = $region48
        $region47: #{tpu_custom_call.1} parent=31 // pred_region
          %s358 = ssub.s32 128, 128
          %359 = vsyncadd %s350, %s358
          %s360 = smul.addr %s27, 128
          %s361 = scalar_lea.hbm %s3, %s360
          %s363 = sshll.u32 %s353, 4
          %s364 = int_to_ptr.vmem [resolvable:$true] %s363
          %366 = dma.vmem_to_hbm [thread:$0]  %s364, 128, %s361, %s350
        $region48: #{tpu_custom_call.1} parent=31 // pred_fallthru
          _
      $region32: #{tpu_custom_call.1} parent=5 // pred_fallthru
        _
      %p367 = scmp.le.s32.totalorder 2, %s18
      // Predicated region
      $region49: #{tpu_custom_call.1} parent=5 // pred_check
        %p368 = pneg %p367
      $region50: #{tpu_custom_call.1} parent=5 // pred_check_branch
        %370 = sbr.rel (%p368) target = $region52
      $region51: #{tpu_custom_call.1} parent=5 // pred_region
        %s371 = ssub.s32 %s18, 2
        // Predicated region
        $region53: #{tpu_custom_call.1} parent=51 // pred_check
          %p372 = pneg %p136
        $region54: #{tpu_custom_call.1} parent=51 // pred_check_branch
          %374 = sbr.rel (%p372) target = $region56
        $region55: #{tpu_custom_call.1} parent=51 // pred_region
          %s375 = sand.u32 %s121, 1
          %s376 = scalar_lea.sflag [#allocation4], %s375
          %s377 = sand.u32 %s121, 1
          %s378 = smul.addr %s377, 8
          %s379 = scalar_lea.vmem [#allocation7], %s378
          %380 = dma.done %s376, 128
        $region56: #{tpu_custom_call.1} parent=51 // pred_fallthru
          _
      $region52: #{tpu_custom_call.1} parent=5 // pred_fallthru
        _
    $region6: #{tpu_custom_call.1} parent=1 // loop_footer
      %s22 = sadd.s32 1, %s18
    $region7: #{tpu_custom_call.1} parent=1 // loop_footer_branch
      %17 = sbr.rel target = $region3
    $region8: #{tpu_custom_call.1} parent=1 // loop_exit
      _
    %381 = vsyncpa [#allocation3], 1
    %s382 = scalar_lea.sflag [#allocation3], 1
    %383 = vsyncpa %s382, 1
    %384 = vsyncpa [#allocation6], 1
    %s385 = scalar_lea.sflag [#allocation6], 1
    %386 = vsyncpa %s385, 1
    %387 = vsyncpa [#allocation4], 1
    %s388 = scalar_lea.sflag [#allocation4], 1
    %389 = vsyncpa %s388, 1

</llo_original>
